<compile_context>
chip_gen: v7x
topology: tpu7x:2x2x1
jax: 0.10.0
libtpu: 0.0.40
codegen_flags: <defaults>
</compile_context>

<pallas_src>
import jax
import jax.numpy as jnp
from jax.experimental import pallas as pl
from jax.experimental.pallas import tpu as pltpu

_LANE = 128
_SUBLANE = 8


def _round_up(x, m):
    return ((x + m - 1) // m) * m


def _vmem_capacity_bytes():
    try:
        return int(pltpu.get_tpu_info().vmem_capacity_bytes)
    except Exception:
        return 64 << 20  # conservative fallback (v7x per-core VMEM)


# --------------------------- kernels ------------------------------------

def _head_kernel(x_ref, w1_ref, b1_ref, w2_ref, b2_ref, o_ref):
    # Cast x to bf16 in-kernel (no wrapper-side pad/cast pass over HBM).
    x = x_ref[...].astype(jnp.bfloat16)
    h = jnp.dot(x, w1_ref[...], preferred_element_type=jnp.float32)
    # Bias add + tanh in f32 (safe on v5e: no bf16 VPU/EUP there).
    h = jnp.tanh(h + b1_ref[...])
    y = jnp.dot(h.astype(jnp.bfloat16), w2_ref[...],
                preferred_element_type=jnp.float32)
    # Lane-dense (tm, 128*k) store.
    o_ref[...] = (y + b2_ref[...]).astype(o_ref.dtype)


def _head_kernel_ktiled(x_ref, w1_ref, b1_ref, w2_ref, b2_ref, o_ref, acc_ref):
    k = pl.program_id(1)

    @pl.when(k == 0)
    def _():
        acc_ref[...] = jnp.zeros_like(acc_ref)

    x = x_ref[...].astype(jnp.bfloat16)
    acc_ref[...] += jnp.dot(x, w1_ref[...], preferred_element_type=jnp.float32)

    @pl.when(k == pl.num_programs(1) - 1)
    def _():
        h = jnp.tanh(acc_ref[...] + b1_ref[...])
        y = jnp.dot(h.astype(jnp.bfloat16), w2_ref[...],
                    preferred_element_type=jnp.float32)
        o_ref[...] = (y + b2_ref[...]).astype(o_ref.dtype)


# --------------------------- wrapper ------------------------------------

def classification_head(hidden_states, w_dense, b_dense, w_out, b_out,
                        *, tm=None, tk=512, force_k_tiling=False):
    """hidden_states: (B, S, D); w_dense: (D, H); b_dense: (H,);
       w_out: (H, C); b_out: (C,).  Returns (B, S, C)."""
    B, S, D = hidden_states.shape
    H = w_dense.shape[1]
    C = w_out.shape[1]
    M = B * S
    out_dtype = hidden_states.dtype
    x_isize = jnp.dtype(hidden_states.dtype).itemsize
    out_isize = jnp.dtype(out_dtype).itemsize

    vmem_cap = _vmem_capacity_bytes()
    headroom = 6 << 20
    budget = max(vmem_cap - (4 << 20), 16 << 20)

    # Lane-dense logits: pad C to a multiple of 128 (sliced back below).
    c_pad = _round_up(C, _LANE)

    # Weights (in, out) layout; bf16 MXU operands, f32 biases.
    w1 = w_dense.astype(jnp.bfloat16)
    w2 = jnp.pad(w_out, ((0, 0), (0, c_pad - C))).astype(jnp.bfloat16)
    b1 = b_dense.reshape(1, H).astype(jnp.float32)
    b2 = jnp.pad(b_out, (0, c_pad - C)).reshape(1, c_pad).astype(jnp.float32)

    # Activation: flat view only — no padding, no dtype cast in the wrapper.
    x2d = hidden_states.reshape(M, D)

    # --- row-tile selection ---------------------------------------------
    if tm is None:
        tm = 1024 if vmem_cap >= (96 << 20) else 512  # v5e/v6e vs v7x
    if M >= 512:
        # Ensure >= 2 row tiles so the "parallel" axis can shard across both
        # v7x TensorCores (harmless on single-TC v5e/v6e).
        tm = min(tm, max(256, _round_up(pl.cdiv(M, 2), 256)))
    tm = _round_up(min(tm, _round_up(M, _SUBLANE)), _SUBLANE)

    w1_bytes = D * H * 2
    use_k_tiling = force_k_tiling or (w1_bytes > int(0.35 * vmem_cap))

    cost = pl.CostEstimate(
        flops=2 * M * (D * H + H * c_pad),
        transcendentals=M * H,
        bytes_accessed=(M * D * x_isize + D * H * 2 + H * c_pad * 2
                        + (H + c_pad) * 4 + M * c_pad * out_isize),
    )
    out_shape = jax.ShapeDtypeStruct((M, c_pad), out_dtype)

    if not use_k_tiling:
        # -------- simple path: W1 fully resident in VMEM -----------------
        def need(tm_):
            return (2 * tm_ * D * x_isize            # double-buffered x tile
                    + 2 * tm_ * c_pad * out_isize    # double-buffered out tile
                    + w1_bytes + H * c_pad * 2       # single-buffered weights
                    + (H + c_pad) * 4                # biases (f32)
                    + headroom)

        while need(tm) > budget and tm > 4 * _SUBLANE:
            tm = max(4 * _SUBLANE, _round_up(tm // 2, _SUBLANE))
        grid_m = pl.cdiv(M, tm)
        vmem_limit = int(max(min(need(tm), budget), min(32 << 20, budget)))

        out2d = pl.pallas_call(
            _head_kernel,
            out_shape=out_shape,
            grid_spec=pltpu.PrefetchScalarGridSpec(
                num_scalar_prefetch=0,
                grid=(grid_m,),
                in_specs=[
                    pl.BlockSpec((tm, D), lambda i: (i, 0)),       # streamed x
                    pl.BlockSpec((D, H), lambda i: (0, 0),
                                 pipeline_mode=pl.Buffered(1)),    # resident W1
                    pl.BlockSpec((1, H), lambda i: (0, 0),
                                 pipeline_mode=pl.Buffered(1)),    # resident b1
                    pl.BlockSpec((H, c_pad), lambda i: (0, 0),
                                 pipeline_mode=pl.Buffered(1)),    # resident W2
                    pl.BlockSpec((1, c_pad), lambda i: (0, 0),
                                 pipeline_mode=pl.Buffered(1)),    # resident b2
                ],
                out_specs=pl.BlockSpec((tm, c_pad), lambda i: (i, 0)),
            ),
            compiler_params=pltpu.CompilerParams(
                dimension_semantics=("parallel",),
                vmem_limit_bytes=vmem_limit,
            ),
            cost_estimate=cost,
        )(x2d, w1, b1, w2, b2)
    else:
        # -------- K-tiled path: stream W1 over D, f32 accumulator --------
        tk = _round_up(min(tk, _round_up(D, _LANE)), _LANE)

        def need(tm_, tk_):
            return (2 * tm_ * tk_ * x_isize          # double-buffered x tile
                    + 2 * tk_ * H * 2                # double-buffered W1 slab
                    + 2 * tm_ * c_pad * out_isize    # double-buffered out tile
                    + tm_ * H * 4                    # f32 accumulator scratch
                    + H * c_pad * 2 + (H + c_pad) * 4
                    + headroom)

        while need(tm, tk) > budget and (tk > _LANE or tm > 4 * _SUBLANE):
            if tk > _LANE:
                tk = max(_LANE, ((tk // 2) // _LANE) * _LANE)
            else:
                tm = max(4 * _SUBLANE, _round_up(tm // 2, _SUBLANE))
        vmem_limit = int(max(min(need(tm, tk), budget), min(32 << 20, budget)))

        # Zero-pad the reduction dim so ragged K tiles never read garbage
        # (zeros are exact under accumulation).  Usually a no-op for real D.
        d_pad = _round_up(D, tk)
        if d_pad != D:
            x2d = jnp.pad(x2d, ((0, 0), (0, d_pad - D)))
            w1 = jnp.pad(w1, ((0, d_pad - D), (0, 0)))
        grid_m = pl.cdiv(M, tm)
        grid_k = d_pad // tk

        out2d = pl.pallas_call(
            _head_kernel_ktiled,
            out_shape=out_shape,
            grid_spec=pltpu.PrefetchScalarGridSpec(
                num_scalar_prefetch=0,
                grid=(grid_m, grid_k),
                in_specs=[
                    pl.BlockSpec((tm, tk), lambda i, k: (i, k)),   # x tile
                    pl.BlockSpec((tk, H), lambda i, k: (k, 0)),    # W1 K-slab
                    pl.BlockSpec((1, H), lambda i, k: (0, 0),
                                 pipeline_mode=pl.Buffered(1)),    # resident b1
                    pl.BlockSpec((H, c_pad), lambda i, k: (0, 0),
                                 pipeline_mode=pl.Buffered(1)),    # resident W2
                    pl.BlockSpec((1, c_pad), lambda i, k: (0, 0),
                                 pipeline_mode=pl.Buffered(1)),    # resident b2
                ],
                out_specs=pl.BlockSpec((tm, c_pad), lambda i, k: (i, 0)),
                scratch_shapes=[pltpu.VMEM((tm, H), jnp.float32)],
            ),
            compiler_params=pltpu.CompilerParams(
                dimension_semantics=("parallel", "arbitrary"),
                vmem_limit_bytes=vmem_limit,
            ),
            cost_estimate=cost,
        )(x2d, w1, b1, w2, b2)

    return out2d[:, :C].reshape(B, S, C)


# --------------------------- test harness -------------------------------

def _init_params(key, input_dim, inner_dim, num_classes):
    # Deterministic nn.Linear-style init: U(-1/sqrt(fan_in), 1/sqrt(fan_in)).
    k1, k2, k3, k4 = jax.random.split(key, 4)
    lim1 = 1.0 / jnp.sqrt(input_dim)
    lim2 = 1.0 / jnp.sqrt(inner_dim)
    w_dense = jax.random.uniform(k1, (input_dim, inner_dim),
                                 minval=-lim1, maxval=lim1, dtype=jnp.float32)
    b_dense = jax.random.uniform(k2, (inner_dim,),
                                 minval=-lim1, maxval=lim1, dtype=jnp.float32)
    w_out = jax.random.uniform(k3, (inner_dim, num_classes),
                               minval=-lim2, maxval=lim2, dtype=jnp.float32)
    b_out = jax.random.uniform(k4, (inner_dim,)[:0] + (num_classes,),
                               minval=-lim2, maxval=lim2, dtype=jnp.float32)
    return w_dense, b_dense, w_out, b_out


if __name__ == "__main__":
    key = jax.random.PRNGKey(0)

    # --- test 1: simple (resident-W1) path -------------------------------
    B, S, D, H, C = 2, 8, 32, 32, 8
    kx, kp, key = jax.random.split(key, 3)
    x = jax.random.normal(kx, (B, S, D), dtype=jnp.float32)
    w_dense, b_dense, w_out, b_out = _init_params(kp, D, H, C)

    out = classification_head(x, w_dense, b_dense, w_out, b_out)
    out = jax.block_until_ready(out)
    ref = jnp.tanh(x @ w_dense + b_dense) @ w_out + b_out
    assert out.shape == (B, S, C)
    # bf16 MXU operands with f32 accumulation -> loosened tolerance vs fp32.
    assert jnp.allclose(out, ref, atol=2e-2, rtol=2e-2), (
        float(jnp.max(jnp.abs(out - ref))))

    # --- test 2: K-tiled path (forced, 2 K-steps) -------------------------
    B2, S2, D2, H2, C2 = 2, 16, 256, 64, 8
    kx2, kp2 = jax.random.split(key)
    x2 = jax.random.normal(kx2, (B2, S2, D2), dtype=jnp.float32)
    w_dense2, b_dense2, w_out2, b_out2 = _init_params(kp2, D2, H2, C2)

    out2 = classification_head(x2, w_dense2, b_dense2, w_out2, b_out2,
                               tk=128, force_k_tiling=True)
    out2 = jax.block_until_ready(out2)
    ref2 = jnp.tanh(x2 @ w_dense2 + b_dense2) @ w_out2 + b_out2
    assert out2.shape == (B2, S2, C2)
    assert jnp.allclose(out2, ref2, atol=3e-2, rtol=3e-2), (
        float(jnp.max(jnp.abs(out2 - ref2))))

    print("KERNEL_OK")
</pallas_src>

<mosaic_0001>
module attributes {stable_mosaic.version = 11 : i64} {
  func.func @_head_kernel(%arg0: i32, %arg1: memref<16x32xf32, #tpu.memory_space<vmem>>, %arg2: memref<32x32xbf16, #tpu.memory_space<vmem>>, %arg3: memref<1x32xf32, #tpu.memory_space<vmem>>, %arg4: memref<32x128xbf16, #tpu.memory_space<vmem>>, %arg5: memref<1x128xf32, #tpu.memory_space<vmem>>, %arg6: memref<16x128xf32, #tpu.memory_space<vmem>>) attributes {dimension_semantics = [#tpu.dimension_semantics<parallel>], iteration_bounds = array<i64: 1>, scalar_prefetch = 0 : i64, scratch_operands = 0 : i64, tpu.core_type = #tpu.core_type<tc>, window_params = [{transform_indices = @transform_0, window_bounds = array<i64: 16, 32>}, {pipeline_mode = #tpu.pipeline_mode<synchronous>, transform_indices = @transform_1, window_bounds = array<i64: 32, 32>}, {pipeline_mode = #tpu.pipeline_mode<synchronous>, transform_indices = @transform_2, window_bounds = array<i64: 1, 32>}, {pipeline_mode = #tpu.pipeline_mode<synchronous>, transform_indices = @transform_3, window_bounds = array<i64: 32, 128>}, {pipeline_mode = #tpu.pipeline_mode<synchronous>, transform_indices = @transform_4, window_bounds = array<i64: 1, 128>}, {transform_indices = @transform_5, window_bounds = array<i64: 16, 128>}]} {
    %c0 = arith.constant 0 : index
    %c0_0 = arith.constant 0 : index
    %0 = vector.load %arg1[%c0, %c0_0] : memref<16x32xf32, #tpu.memory_space<vmem>>, vector<16x32xf32>
    %1 = arith.truncf %0 : vector<16x32xf32> to vector<16x32xbf16>
    %c0_1 = arith.constant 0 : index
    %c0_2 = arith.constant 0 : index
    %2 = vector.load %arg2[%c0_1, %c0_2] : memref<32x32xbf16, #tpu.memory_space<vmem>>, vector<32x32xbf16>
    %cst = arith.constant dense<0.000000e+00> : vector<16x32xf32>
    %3 = tpu.matmul %1, %2, %cst {dimension_numbers = #tpu.dot_dimension_numbers<[1], [0], [0], [1], [0, 0, 1, 1], [], []>} : vector<16x32xbf16>, vector<32x32xbf16>, vector<16x32xf32> -> vector<16x32xf32>
    %c0_3 = arith.constant 0 : index
    %c0_4 = arith.constant 0 : index
    %4 = vector.load %arg3[%c0_3, %c0_4] : memref<1x32xf32, #tpu.memory_space<vmem>>, vector<1x32xf32>
    %5 = vector.broadcast %4 : vector<1x32xf32> to vector<16x32xf32>
    %6 = arith.addf %3, %5 : vector<16x32xf32>
    %7 = math.tanh %6 : vector<16x32xf32>
    %8 = arith.truncf %7 : vector<16x32xf32> to vector<16x32xbf16>
    %c0_5 = arith.constant 0 : index
    %c0_6 = arith.constant 0 : index
    %9 = vector.load %arg4[%c0_5, %c0_6] : memref<32x128xbf16, #tpu.memory_space<vmem>>, vector<32x128xbf16>
    %cst_7 = arith.constant dense<0.000000e+00> : vector<16x128xf32>
    %10 = tpu.matmul %8, %9, %cst_7 {dimension_numbers = #tpu.dot_dimension_numbers<[1], [0], [0], [1], [0, 0, 1, 1], [], []>} : vector<16x32xbf16>, vector<32x128xbf16>, vector<16x128xf32> -> vector<16x128xf32>
    %c0_8 = arith.constant 0 : index
    %c0_9 = arith.constant 0 : index
    %11 = vector.load %arg5[%c0_8, %c0_9] : memref<1x128xf32, #tpu.memory_space<vmem>>, vector<1x128xf32>
    %12 = vector.broadcast %11 : vector<1x128xf32> to vector<16x128xf32>
    %13 = arith.addf %10, %12 : vector<16x128xf32>
    %c0_10 = arith.constant 0 : index
    %c0_11 = arith.constant 0 : index
    %14 = vector.load %arg6[%c0_10, %c0_11] : memref<16x128xf32, #tpu.memory_space<vmem>>, vector<16x128xf32>
    tpu.vector_store %arg6[%c0_10, %c0_11], %13 {strides = array<i32>} : memref<16x128xf32, #tpu.memory_space<vmem>>, vector<16x128xf32>,
    return
  }
  func.func @transform_0(%arg0: i32) -> (i32, i32) {
    %c0_i32 = arith.constant 0 : i32
    %c0_i32_0 = arith.constant 0 : i32
    return %arg0, %c0_i32 : i32, i32
  }
  func.func @transform_1(%arg0: i32) -> (i32, i32) {
    %c0_i32 = arith.constant 0 : i32
    %c0_i32_0 = arith.constant 0 : i32
    %c0_i32_1 = arith.constant 0 : i32
    return %c0_i32, %c0_i32_0 : i32, i32
  }
  func.func @transform_2(%arg0: i32) -> (i32, i32) {
    %c0_i32 = arith.constant 0 : i32
    %c0_i32_0 = arith.constant 0 : i32
    %c0_i32_1 = arith.constant 0 : i32
    return %c0_i32, %c0_i32_0 : i32, i32
  }
  func.func @transform_3(%arg0: i32) -> (i32, i32) {
    %c0_i32 = arith.constant 0 : i32
    %c0_i32_0 = arith.constant 0 : i32
    %c0_i32_1 = arith.constant 0 : i32
    return %c0_i32, %c0_i32_0 : i32, i32
  }
  func.func @transform_4(%arg0: i32) -> (i32, i32) {
    %c0_i32 = arith.constant 0 : i32
    %c0_i32_0 = arith.constant 0 : i32
    %c0_i32_1 = arith.constant 0 : i32
    return %c0_i32, %c0_i32_0 : i32, i32
  }
  func.func @transform_5(%arg0: i32) -> (i32, i32) {
    %c0_i32 = arith.constant 0 : i32
    %c0_i32_0 = arith.constant 0 : i32
    return %arg0, %c0_i32 : i32, i32
  }
}

</mosaic_0001>

<llo_original>
// kernel: tpu_custom_call.1
$region0: #{tpu_custom_call.1}
  #allocation0 [shape = 'u32[]', space=smem, size = 0x4, offset = 0x4, fixed_abs, tag = 'smem constant byte address 0x4 - core index']
  #allocation1 [shape = 'u32[144,128]{1,0:T(1,128)}', space=vmem, size = 0x12000, scoped, tag = 'internal scratch']
  %s0 = inlined_call_operand.hbm [shape: f32[16,32], index: 0, kind: input, shape index: {}]
  %s1 = inlined_call_operand.hbm [shape: bf16[32,32], index: 1, kind: input, shape index: {}]
  %s2 = inlined_call_operand.vmem [shape: f32[1,32], index: 2, kind: input, shape index: {}]
  %s3 = inlined_call_operand.hbm [shape: bf16[32,128], index: 3, kind: input, shape index: {}]
  %s4 = inlined_call_operand.vmem [shape: f32[1,128], index: 4, kind: input, shape index: {}]
  %s5 = inlined_call_operand.hbm [shape: f32[16,128], index: 5, kind: output, shape index: {}]
  %s6 = sld [smem:[#allocation0]]
  $region42: #{tpu_custom_call.1} parent=0
    _
  %s8 = ssub.s32 1, %s6
  %s9 = scalar_select 0, %s8, %s6
  $region1: #{tpu_custom_call.1} parent=0
    #allocation2 [shape = 'u8[8192]{0}', space=vmem, size = 0x2000, scoped, tag = 'input window, operand 0, single buffered']
    #allocation3 [shape = 's32[1]{0}', space=sflag, size = 0x4, scoped, tag = 'scoped memory for tpu_custom_call.1']
    #allocation4 [shape = 's32[1]{0}', space=sflag, size = 0x4, scoped, tag = 'scoped memory for tpu_custom_call.1']
    #allocation5 [shape = 'u8[8192]{0}', space=vmem, size = 0x2000, scoped, tag = 'input window, operand 1, single buffered']
    #allocation6 [shape = 's32[1]{0}', space=sflag, size = 0x4, scoped, tag = 'scoped memory for tpu_custom_call.1']
    #allocation7 [shape = 'u8[8192]{0}', space=vmem, size = 0x2000, scoped, tag = 'input window, operand 3, single buffered']
    #allocation8 [shape = 'u8[8192]{0}', space=vmem, size = 0x2000, scoped, tag = 'output window, operand 0, single buffered']
    %10 = vsyncpa [#allocation3], 0
    %11 = vsyncpa [#allocation6], 0
    %12 = vsyncpa [#allocation4], 0
    // Predicated region
    $region2: #{tpu_custom_call.1} parent=1 // pred_check
      _
    $region3: #{tpu_custom_call.1} parent=1 // pred_check_branch
      %14 = sbr.rel (0) target = $region5
    $region4: #{tpu_custom_call.1} parent=1 // pred_region
      %s16 = ssub.s32 256, 256
      %17 = vsyncadd [#allocation3], %s16
      %s18 = sshll.u32 [#allocation2], 4
      %s19 = int_to_ptr.vmem [resolvable:$true] %s18
      %24 = dma.hbm_to_vmem [thread:$0]  %s0, 256, %s19, [#allocation3], 128, 128, 8
    $region5: #{tpu_custom_call.1} parent=1 // pred_fallthru
      _
    // Predicated region
    $region6: #{tpu_custom_call.1} parent=1 // pred_check
      _
    $region7: #{tpu_custom_call.1} parent=1 // pred_check_branch
      %26 = sbr.rel (0) target = $region9
    $region8: #{tpu_custom_call.1} parent=1 // pred_region
      %s28 = ssub.s32 256, 256
      %29 = vsyncadd [#allocation6], %s28
      %s30 = sshll.u32 [#allocation5], 4
      %s31 = int_to_ptr.vmem [resolvable:$true] %s30
      %36 = dma.hbm_to_vmem [thread:$0]  %s1, 256, %s31, [#allocation6], 64, 64, 4
    $region9: #{tpu_custom_call.1} parent=1 // pred_fallthru
      _
    // Predicated region
    $region10: #{tpu_custom_call.1} parent=1 // pred_check
      _
    $region11: #{tpu_custom_call.1} parent=1 // pred_check_branch
      %38 = sbr.rel (0) target = $region13
    $region12: #{tpu_custom_call.1} parent=1 // pred_region
      _
    $region13: #{tpu_custom_call.1} parent=1 // pred_fallthru
      _
    // Predicated region
    $region14: #{tpu_custom_call.1} parent=1 // pred_check
      _
    $region15: #{tpu_custom_call.1} parent=1 // pred_check_branch
      %40 = sbr.rel (0) target = $region17
    $region16: #{tpu_custom_call.1} parent=1 // pred_region
      %s42 = ssub.s32 256, 256
      %43 = vsyncadd [#allocation6], %s42
      %s44 = sshll.u32 [#allocation7], 4
      %s45 = int_to_ptr.vmem [resolvable:$true] %s44
      %50 = dma.hbm_to_vmem [thread:$0]  %s3, 256, %s45, [#allocation6], 64, 64, 4
    $region17: #{tpu_custom_call.1} parent=1 // pred_fallthru
      _
    // Predicated region
    $region18: #{tpu_custom_call.1} parent=1 // pred_check
      _
    $region19: #{tpu_custom_call.1} parent=1 // pred_check_branch
      %52 = sbr.rel (0) target = $region21
    $region20: #{tpu_custom_call.1} parent=1 // pred_region
      _
    $region21: #{tpu_custom_call.1} parent=1 // pred_fallthru
      _
    // Predicated region
    $region22: #{tpu_custom_call.1} parent=1 // pred_check
      _
    $region23: #{tpu_custom_call.1} parent=1 // pred_check_branch
      %54 = sbr.rel (0) target = $region25
    $region24: #{tpu_custom_call.1} parent=1 // pred_region
      %55 = dma.done [#allocation3], 256
    $region25: #{tpu_custom_call.1} parent=1 // pred_fallthru
      _
    // Predicated region
    $region26: #{tpu_custom_call.1} parent=1 // pred_check
      _
    $region27: #{tpu_custom_call.1} parent=1 // pred_check_branch
      %57 = sbr.rel (0) target = $region29
    $region28: #{tpu_custom_call.1} parent=1 // pred_region
      %58 = dma.done [#allocation6], 256
    $region29: #{tpu_custom_call.1} parent=1 // pred_fallthru
      _
    // Predicated region
    $region30: #{tpu_custom_call.1} parent=1 // pred_check
      _
    $region31: #{tpu_custom_call.1} parent=1 // pred_check_branch
      %60 = sbr.rel (0) target = $region33
    $region32: #{tpu_custom_call.1} parent=1 // pred_region
      %61 = dma.done [#allocation6], 256
    $region33: #{tpu_custom_call.1} parent=1 // pred_fallthru
      _
    %v63 = vld [vmem:[#allocation2] sm:$0xff]
    %v64 = vld [vmem:[#allocation2 + $0x8] sm:$0xff]
    %v65 = vpack.c.bf16 %v64, %v63
    %v66 = vld [vmem:[#allocation5] sm:$0xf]
    %v67 = vld [vmem:[#allocation5 + $0x4] sm:$0xf]
    %v68 = vld [vmem:[#allocation5 + $0x8] sm:$0xf]
    %v69 = vld [vmem:[#allocation5 + $0xc] sm:$0xf]
    %v70 = vld [vmem:[%s2] sm:$0x1]
    %v72 = vlaneseq
    %v73 = vshrl.u32 %v72, 7
    %v74 = vsub.s32 0, %v73
    %v75 = vrot.slane %v70, %v74
    %v81 = vunpack.c.l.b16 %v66
    %v82 = vunpack.c.l.b16 %v67
    %v83 = vunpack.c.l.b16 %v68
    %v84 = vunpack.c.l.b16 %v69
    %v85 = vpack.c.b16 %v82, %v81
    %v86 = vpack.c.b16 %v84, %v83
    %vm89 = vcmask 261120
    %v91 = vsel %vm89, %v65, 0
    %93 = vmatprep.subr.bf16.mxu0 0
    %94 = vmatpush1.bf16.msra.mxu0 %v85
    %95 = vmatprep.subr.bf16.mxu0 0
    %96 = vmatpush1.bf16.msra.mxu0 %v86
    %97 = vmatprep.subr.bf16.mxu0 0
    %98 = vmatpush1.bf16.msra.mxu0 0
    %99 = vmatprep.subr.bf16.mxu0 0
    %100 = vmatpush1.bf16.msra.mxu0 0
    %101 = vmatprep.subr.bf16.mxu0 0
    %102 = vmatpush1.bf16.msra.mxu0 0
    %103 = vmatprep.subr.bf16.mxu0 0
    %104 = vmatpush1.bf16.msra.mxu0 0
    %105 = vmatprep.subr.bf16.mxu0 0
    %106 = vmatpush1.bf16.msra.mxu0 0
    %107 = vmatprep.subr.bf16.mxu0 0
    %108 = vmatpush1.bf16.msra.mxu0 0
    %109 = vmatprep.subr.bf16.mxu0 0
    %110 = vmatpush1.bf16.msra.mxu0 0
    %111 = vmatprep.subr.bf16.mxu0 0
    %112 = vmatpush1.bf16.msra.mxu0 0
    %113 = vmatprep.subr.bf16.mxu0 0
    %114 = vmatpush1.bf16.msra.mxu0 0
    %115 = vmatprep.subr.bf16.mxu0 0
    %116 = vmatpush1.bf16.msra.mxu0 0
    %117 = vmatprep.subr.bf16.mxu0 0
    %118 = vmatpush1.bf16.msra.mxu0 0
    %119 = vmatprep.subr.bf16.mxu0 0
    %120 = vmatpush1.bf16.msra.mxu0 0
    %121 = vmatprep.subr.bf16.mxu0 0
    %122 = vmatpush1.bf16.msra.mxu0 0
    %123 = vmatprep.subr.bf16.mxu0 0
    %124 = vmatpush1.bf16.msra.mxu0 0
    %125 = vmatprep.mubr.bf16.mxu0 0
    %126 = vmatmul.mubr.bf16.gmra.mrb[0].mxu0 %v91
    %v127 = vpop.f32.mrb[0].mxu0
    %v128 = vadd.f32 %v75, %v127
    %v129 = vpop.f32.mrb[0].mxu0
    %v130 = vpop.f32.mrb[0].mxu0
    %v131 = vadd.f32 %v75, %v130
    %v132 = vpop.f32.mrb[0].mxu0
    %133 = vdwg.mxu0
    %v134 = vtanh.pop %v128
    %v135 = vtanh.pop %v131
    %v136 = vpack.c.bf16 %v135, %v134
    %v137 = vld [vmem:[#allocation7] sm:$0xf]
    %v138 = vld [vmem:[#allocation7 + $0x4] sm:$0xf]
    %v139 = vld [vmem:[#allocation7 + $0x8] sm:$0xf]
    %v140 = vld [vmem:[#allocation7 + $0xc] sm:$0xf]
    %v141 = vld [vmem:[%s4] sm:$0x1]
    %v143 = vlaneseq
    %v144 = vshrl.u32 %v143, 7
    %v145 = vsub.s32 0, %v144
    %v146 = vrot.slane %v141, %v145
    %v152 = vunpack.c.l.b16 %v137
    %v153 = vunpack.c.l.b16 %v138
    %v154 = vunpack.c.l.b16 %v139
    %v155 = vunpack.c.l.b16 %v140
    %v156 = vpack.c.b16 %v153, %v152
    %v157 = vpack.c.b16 %v155, %v154
    %v161 = vsel %vm89, %v136, 0
    %163 = vmatprep.subr.bf16.mxu0 0
    %164 = vmatpush1.bf16.msra.mxu0 %v156
    %165 = vmatprep.subr.bf16.mxu0 0
    %166 = vmatpush1.bf16.msra.mxu0 %v157
    %167 = vmatprep.subr.bf16.mxu0 0
    %168 = vmatpush1.bf16.msra.mxu0 0
    %169 = vmatprep.subr.bf16.mxu0 0
    %170 = vmatpush1.bf16.msra.mxu0 0
    %171 = vmatprep.subr.bf16.mxu0 0
    %172 = vmatpush1.bf16.msra.mxu0 0
    %173 = vmatprep.subr.bf16.mxu0 0
    %174 = vmatpush1.bf16.msra.mxu0 0
    %175 = vmatprep.subr.bf16.mxu0 0
    %176 = vmatpush1.bf16.msra.mxu0 0
    %177 = vmatprep.subr.bf16.mxu0 0
    %178 = vmatpush1.bf16.msra.mxu0 0
    %179 = vmatprep.subr.bf16.mxu0 0
    %180 = vmatpush1.bf16.msra.mxu0 0
    %181 = vmatprep.subr.bf16.mxu0 0
    %182 = vmatpush1.bf16.msra.mxu0 0
    %183 = vmatprep.subr.bf16.mxu0 0
    %184 = vmatpush1.bf16.msra.mxu0 0
    %185 = vmatprep.subr.bf16.mxu0 0
    %186 = vmatpush1.bf16.msra.mxu0 0
    %187 = vmatprep.subr.bf16.mxu0 0
    %188 = vmatpush1.bf16.msra.mxu0 0
    %189 = vmatprep.subr.bf16.mxu0 0
    %190 = vmatpush1.bf16.msra.mxu0 0
    %191 = vmatprep.subr.bf16.mxu0 0
    %192 = vmatpush1.bf16.msra.mxu0 0
    %193 = vmatprep.subr.bf16.mxu0 0
    %194 = vmatpush1.bf16.msra.mxu0 0
    %195 = vmatprep.mubr.bf16.mxu0 0
    %196 = vmatmul.mubr.bf16.gmra.mrb[0].mxu0 %v161
    %v197 = vpop.f32.mrb[0].mxu0
    %v198 = vadd.f32 %v146, %v197
    %v199 = vpop.f32.mrb[0].mxu0
    %v200 = vpop.f32.mrb[0].mxu0
    %v201 = vadd.f32 %v146, %v200
    %v202 = vpop.f32.mrb[0].mxu0
    %203 = vdwg.mxu0
    %204 = vst [vmem:[#allocation8] sm:$0xff] %v198
    %205 = vst [vmem:[#allocation8 + $0x8] sm:$0xff] %v201
    // Predicated region
    $region34: #{tpu_custom_call.1} parent=1 // pred_check
      _
    $region35: #{tpu_custom_call.1} parent=1 // pred_check_branch
      %207 = sbr.rel (0) target = $region37
    $region36: #{tpu_custom_call.1} parent=1 // pred_region
      %s209 = ssub.s32 256, 256
      %210 = vsyncadd [#allocation4], %s209
      %s211 = sshll.u32 [#allocation8], 4
      %s212 = int_to_ptr.vmem [resolvable:$true] %s211
      %217 = dma.vmem_to_hbm [thread:$0]  %s212, 256, %s5, [#allocation4], 128, 128, 8
    $region37: #{tpu_custom_call.1} parent=1 // pred_fallthru
      _
    // Predicated region
    $region38: #{tpu_custom_call.1} parent=1 // pred_check
      _
    $region39: #{tpu_custom_call.1} parent=1 // pred_check_branch
      %219 = sbr.rel (0) target = $region41
    $region40: #{tpu_custom_call.1} parent=1 // pred_region
      %220 = dma.done [#allocation4], 256
    $region41: #{tpu_custom_call.1} parent=1 // pred_fallthru
      _
    %221 = vsyncpa [#allocation3], 1
    %222 = vsyncpa [#allocation6], 1
    %223 = vsyncpa [#allocation4], 1

</llo_original>
